<compile_context>
chip_gen: v6e
topology: v6e:2x2x1
jax: 0.10.0
libtpu: 0.0.40
codegen_flags: <defaults>
</compile_context>

<pallas_src>
import functools

import jax
import jax.numpy as jnp
from jax.experimental import pallas as pl
from jax.experimental.pallas import tpu as pltpu

_LANE = 128
_MIB = 1024 * 1024


def _attention_netplus_kernel(x_ref, w_ref, b_ref, o_ref, *, pack_rows):
    """One batch tile: y = x @ W + b, then per-row min-max normalization."""
    # (TB, IN) @ (IN, OUT) on the MXU, f32 accumulation.
    y = jnp.dot(x_ref[...], w_ref[...], preferred_element_type=jnp.float32)
    y = y + b_ref[...].astype(jnp.float32)            # (TB, OUT) + (1, OUT) broadcast

    # torch.min/max over dim=1, broadcast back.
    y_min = jnp.min(y, axis=-1, keepdims=True)        # (TB, 1)
    y_max = jnp.max(y, axis=-1, keepdims=True)        # (TB, 1)
    # EUP reciprocal of the (TB, 1) range instead of a (TB, OUT) divide (perf review).
    # approx=False keeps the 1e-5 self-test tolerance. Constant rows give inf/nan,
    # matching the PyTorch reference behavior.
    inv = pl.reciprocal(y_max - y_min, approx=False)
    yn = (y - y_min) * inv                             # (TB, OUT)

    if pack_rows > 1:
        tb, out_f = yn.shape
        # Repack 'pack_rows' normalized rows into one 128-lane row so the final store
        # is a dense (unmasked) vst. Row-major bytes are unchanged.
        yn = yn.reshape(tb // pack_rows, pack_rows * out_f)

    o_ref[...] = yn.astype(o_ref.dtype)


def _vmem_limit_bytes():
    """Generation-aware VMEM budget (v5e/v6e: 128 MiB physical, v7x: 64 MiB per TC)."""
    cap = None
    try:
        cap = getattr(pltpu.get_tpu_info(), "vmem_capacity_bytes", None)
    except Exception:
        cap = None
    if not cap:
        cap = 64 * _MIB                    # smallest physical VMEM across v5e/v6e/v7x
    # Request at most half the physical VMEM, capped at 40 MiB:
    #   v5e/v6e (128 MiB) -> 40 MiB (raises the 16/32 MiB scoped defaults)
    #   v7x     (64 MiB)  -> 32 MiB (safe per-TC headroom)
    return int(min(cap // 2, 40 * _MIB))


def _pick_block_rows(batch, in_f, out_f, itemsize, pack_rows, vmem_limit):
    """Largest sublane-aligned batch tile whose double-buffered, lane-padded x/out
    blocks (plus the resident weight/bias) fit under vmem_limit."""
    pad_lane = lambda n: -(-n // _LANE) * _LANE
    # Dtype-aware sublane alignment: 8 rows for 4-byte, 16 for 2-byte, 32 for 1-byte.
    sub = 8 * max(1, 4 // max(itemsize, 1))
    pad_sub = lambda n: -(-n // sub) * sub
    # For the packed output path the block must also keep (tb // pack_rows) sublane
    # aligned, so align to sub * pack_rows.
    align = sub * pack_rows if pack_rows > 1 else sub

    # Per-row VMEM cost of the pipelined (double-buffered) x and out blocks,
    # including the lane padding of narrow last dims (perf-review fix).
    x_row = 2 * pad_lane(in_f) * itemsize
    if pack_rows > 1:
        o_row = 2 * out_f * itemsize                   # packed rows are already 128-lane dense
    else:
        o_row = 2 * pad_lane(out_f) * itemsize
    per_row = x_row + o_row

    # Resident weight + bias (padded, double-buffered) + headroom for Mosaic scratch.
    fixed = 2 * (pad_sub(in_f) * pad_lane(out_f) + 8 * _LANE) * itemsize + 2 * _MIB
    budget = vmem_limit - fixed
    if budget < per_row * align:
        # TODO(synk): tile out_feature with a two-pass (or resident-accumulator)
        # min/max if the whole weight ever exceeds VMEM; fail loudly for now.
        raise ValueError(
            f"AttentionNetplus kernel: resident weight ({in_f}x{out_f}) plus minimal "
            f"pipelined blocks do not fit the VMEM budget ({vmem_limit} bytes); "
            f"raise vmem_limit_bytes or tile out_feature.")

    tb = (budget // per_row // align) * align
    return int(min(batch, max(align, tb)))


def attention_netplus(x, w_out, b_out, *, block_rows=None, core_parallel=False):
    """JAX/Pallas equivalent of AttentionNetplus.forward.

    x:     (B, in_feature)
    w_out: (out_feature, in_feature)   -- PyTorch nn.Linear weight layout
    b_out: (out_feature,)
    returns (B, out_feature)
    """
    B, IN = x.shape
    OUT, IN_w = w_out.shape
    assert IN == IN_w, (x.shape, w_out.shape)
    dtype = x.dtype
    itemsize = jnp.dtype(dtype).itemsize

    w_t = jnp.transpose(w_out)                         # (IN, OUT): lane-dense matmul output
    b2 = b_out.reshape(1, OUT)

    vmem_limit = _vmem_limit_bytes()

    # Lane-dense output packing factor (avoid masked 16-wide stores).
    pack = _LANE // OUT if (OUT < _LANE and _LANE % OUT == 0 and B % (_LANE // OUT) == 0) else 1

    def build(pack_rows):
        if block_rows is not None:
            tb = int(block_rows)
        else:
            tb = _pick_block_rows(B, IN, OUT, itemsize, pack_rows, vmem_limit)
        tb = min(tb, B)
        if pack_rows > 1 and tb < B:
            step = 8 * pack_rows
            tb = max(step, (tb // step) * step)        # keep packed blocks layout-legal
        grid = (pl.cdiv(B, tb),)

        if pack_rows > 1:
            out_shape = jax.ShapeDtypeStruct((B // pack_rows, pack_rows * OUT), dtype)
            out_spec = pl.BlockSpec((tb // pack_rows, pack_rows * OUT), lambda i: (i, 0))
        else:
            out_shape = jax.ShapeDtypeStruct((B, OUT), dtype)
            out_spec = pl.BlockSpec((tb, OUT), lambda i: (i, 0))

        # v7x: pltpu.CORE_PARALLEL actually splits the batch axis across the 2 TCs
        # ("parallel" keeps portable single-TC codegen on v5e/v6e).
        semantics = (pltpu.CORE_PARALLEL,) if core_parallel else ("parallel",)

        cost = pl.CostEstimate(
            flops=2 * B * IN * OUT,
            transcendentals=0,
            bytes_accessed=itemsize * (B * IN + B * OUT + IN * OUT + OUT))

        return pl.pallas_call(
            functools.partial(_attention_netplus_kernel, pack_rows=pack_rows),
            out_shape=out_shape,
            grid=grid,
            in_specs=[
                pl.BlockSpec((tb, IN), lambda i: (i, 0)),   # x tile, pipelined over batch
                pl.BlockSpec((IN, OUT), lambda i: (0, 0)),  # full weight, grid-invariant
                pl.BlockSpec((1, OUT), lambda i: (0, 0)),   # bias, grid-invariant
            ],
            out_specs=out_spec,
            compiler_params=pltpu.CompilerParams(
                dimension_semantics=semantics,
                vmem_limit_bytes=vmem_limit,
            ),
            cost_estimate=cost,
        )

    if pack > 1:
        try:
            out_packed = build(pack)(x, w_t, b2)
            # (B//g, g*OUT) and (B, OUT) have identical row-major bytes -> free reshape.
            return out_packed.reshape(B, OUT)
        except Exception:
            # Portability fallback: if the in-kernel (TB, OUT) -> (TB//g, 128) repack
            # does not lower on this backend, use the plain (masked-store) layout.
            pass
    return build(1)(x, w_t, b2)


if __name__ == "__main__":
    key = jax.random.PRNGKey(0)
    k1, k2, k3 = jax.random.split(key, 3)

    # Small shapes consistent with the module: batch=8, in_feature=32,
    # n_hidden=16 (unused by forward), out_feature=16.
    B, IN, OUT = 8, 32, 16
    x = jax.random.normal(k1, (B, IN), dtype=jnp.float32)
    w_out = jax.random.normal(k2, (OUT, IN), dtype=jnp.float32) * 0.1
    b_out = jax.random.normal(k3, (OUT,), dtype=jnp.float32) * 0.1

    out = attention_netplus(x, w_out, b_out)
    out = jax.block_until_ready(out)

    # Pure-JAX reference (identical math to the PyTorch forward).
    y = x @ w_out.T + b_out
    mn = jnp.min(y, axis=1, keepdims=True)
    mx = jnp.max(y, axis=1, keepdims=True)
    ref = (y - mn) / (mx - mn)

    assert out.shape == ref.shape, (out.shape, ref.shape)
    assert jnp.allclose(out, ref, rtol=1e-5, atol=1e-5), (out, ref)

    print("KERNEL_OK")
</pallas_src>

<mosaic_0001>
module attributes {stable_mosaic.version = 11 : i64} {
  func.func @_attention_netplus_kernel(%arg0: i32, %arg1: memref<8x32xf32, #tpu.memory_space<vmem>>, %arg2: memref<32x16xf32, #tpu.memory_space<vmem>>, %arg3: memref<1x16xf32, #tpu.memory_space<vmem>>, %arg4: memref<1x128xf32, #tpu.memory_space<vmem>>) attributes {dimension_semantics = [#tpu.dimension_semantics<parallel>], iteration_bounds = array<i64: 1>, scalar_prefetch = 0 : i64, scratch_operands = 0 : i64, tpu.core_type = #tpu.core_type<tc>, window_params = [{transform_indices = @transform_0, window_bounds = array<i64: 8, 32>}, {pipeline_mode = #tpu.pipeline_mode<synchronous>, transform_indices = @transform_1, window_bounds = array<i64: 32, 16>}, {pipeline_mode = #tpu.pipeline_mode<synchronous>, transform_indices = @transform_2, window_bounds = array<i64: 1, 16>}, {transform_indices = @transform_3, window_bounds = array<i64: 1, 128>}]} {
    %c0 = arith.constant 0 : index
    %c0_0 = arith.constant 0 : index
    %0 = vector.load %arg1[%c0, %c0_0] : memref<8x32xf32, #tpu.memory_space<vmem>>, vector<8x32xf32>
    %c0_1 = arith.constant 0 : index
    %c0_2 = arith.constant 0 : index
    %1 = vector.load %arg2[%c0_1, %c0_2] : memref<32x16xf32, #tpu.memory_space<vmem>>, vector<32x16xf32>
    %cst = arith.constant dense<0.000000e+00> : vector<8x16xf32>
    %2 = tpu.matmul %0, %1, %cst {dimension_numbers = #tpu.dot_dimension_numbers<[1], [0], [0], [1], [0, 0, 1, 1], [], []>} : vector<8x32xf32>, vector<32x16xf32>, vector<8x16xf32> -> vector<8x16xf32>
    %c0_3 = arith.constant 0 : index
    %c0_4 = arith.constant 0 : index
    %3 = vector.load %arg3[%c0_3, %c0_4] : memref<1x16xf32, #tpu.memory_space<vmem>>, vector<1x16xf32>
    %4 = vector.broadcast %3 : vector<1x16xf32> to vector<8x16xf32>
    %5 = arith.addf %2, %4 : vector<8x16xf32>
    %cst_5 = arith.constant dense<0x7F800000> : vector<8xf32>
    %6 = vector.multi_reduction <minimumf>, %5, %cst_5 [1] : vector<8x16xf32> to vector<8xf32>
    %7 = vector.shape_cast %6 : vector<8xf32> to vector<8x1xf32>
    %cst_6 = arith.constant dense<0xFF800000> : vector<8xf32>
    %8 = vector.multi_reduction <maximumf>, %5, %cst_6 [1] : vector<8x16xf32> to vector<8xf32>
    %9 = vector.shape_cast %8 : vector<8xf32> to vector<8x1xf32>
    %10 = arith.subf %9, %7 : vector<8x1xf32>
    %11 = tpu.reciprocal %10 : vector<8x1xf32> -> vector<8x1xf32>
    %12 = vector.broadcast %7 : vector<8x1xf32> to vector<8x16xf32>
    %13 = arith.subf %5, %12 : vector<8x16xf32>
    %14 = vector.broadcast %11 : vector<8x1xf32> to vector<8x16xf32>
    %15 = arith.mulf %13, %14 : vector<8x16xf32>
    %16 = vector.shape_cast %15 : vector<8x16xf32> to vector<1x128xf32>
    %c0_7 = arith.constant 0 : index
    %c0_8 = arith.constant 0 : index
    %17 = vector.load %arg4[%c0_7, %c0_8] : memref<1x128xf32, #tpu.memory_space<vmem>>, vector<1x128xf32>
    tpu.vector_store %arg4[%c0_7, %c0_8], %16 {strides = array<i32>} : memref<1x128xf32, #tpu.memory_space<vmem>>, vector<1x128xf32>,
    return
  }
  func.func @transform_0(%arg0: i32) -> (i32, i32) {
    %c0_i32 = arith.constant 0 : i32
    %c0_i32_0 = arith.constant 0 : i32
    return %arg0, %c0_i32 : i32, i32
  }
  func.func @transform_1(%arg0: i32) -> (i32, i32) {
    %c0_i32 = arith.constant 0 : i32
    %c0_i32_0 = arith.constant 0 : i32
    %c0_i32_1 = arith.constant 0 : i32
    return %c0_i32, %c0_i32_0 : i32, i32
  }
  func.func @transform_2(%arg0: i32) -> (i32, i32) {
    %c0_i32 = arith.constant 0 : i32
    %c0_i32_0 = arith.constant 0 : i32
    %c0_i32_1 = arith.constant 0 : i32
    return %c0_i32, %c0_i32_0 : i32, i32
  }
  func.func @transform_3(%arg0: i32) -> (i32, i32) {
    %c0_i32 = arith.constant 0 : i32
    %c0_i32_0 = arith.constant 0 : i32
    return %arg0, %c0_i32 : i32, i32
  }
}

module attributes {stable_mosaic.version = 11 : i64} {
  func.func @_attention_netplus_kernel(%arg0: i32, %arg1: memref<8x32xf32, #tpu.memory_space<vmem>>, %arg2: memref<32x16xf32, #tpu.memory_space<vmem>>, %arg3: memref<1x16xf32, #tpu.memory_space<vmem>>, %arg4: memref<8x16xf32, #tpu.memory_space<vmem>>) attributes {dimension_semantics = [#tpu.dimension_semantics<parallel>], iteration_bounds = array<i64: 1>, scalar_prefetch = 0 : i64, scratch_operands = 0 : i64, tpu.core_type = #tpu.core_type<tc>, window_params = [{transform_indices = @transform_0, window_bounds = array<i64: 8, 32>}, {pipeline_mode = #tpu.pipeline_mode<synchronous>, transform_indices = @transform_1, window_bounds = array<i64: 32, 16>}, {pipeline_mode = #tpu.pipeline_mode<synchronous>, transform_indices = @transform_2, window_bounds = array<i64: 1, 16>}, {transform_indices = @transform_3, window_bounds = array<i64: 8, 16>}]} {
    %c0 = arith.constant 0 : index
    %c0_0 = arith.constant 0 : index
    %0 = vector.load %arg1[%c0, %c0_0] : memref<8x32xf32, #tpu.memory_space<vmem>>, vector<8x32xf32>
    %c0_1 = arith.constant 0 : index
    %c0_2 = arith.constant 0 : index
    %1 = vector.load %arg2[%c0_1, %c0_2] : memref<32x16xf32, #tpu.memory_space<vmem>>, vector<32x16xf32>
    %cst = arith.constant dense<0.000000e+00> : vector<8x16xf32>
    %2 = tpu.matmul %0, %1, %cst {dimension_numbers = #tpu.dot_dimension_numbers<[1], [0], [0], [1], [0, 0, 1, 1], [], []>} : vector<8x32xf32>, vector<32x16xf32>, vector<8x16xf32> -> vector<8x16xf32>
    %c0_3 = arith.constant 0 : index
    %c0_4 = arith.constant 0 : index
    %3 = vector.load %arg3[%c0_3, %c0_4] : memref<1x16xf32, #tpu.memory_space<vmem>>, vector<1x16xf32>
    %4 = vector.broadcast %3 : vector<1x16xf32> to vector<8x16xf32>
    %5 = arith.addf %2, %4 : vector<8x16xf32>
    %cst_5 = arith.constant dense<0x7F800000> : vector<8xf32>
    %6 = vector.multi_reduction <minimumf>, %5, %cst_5 [1] : vector<8x16xf32> to vector<8xf32>
    %7 = vector.shape_cast %6 : vector<8xf32> to vector<8x1xf32>
    %cst_6 = arith.constant dense<0xFF800000> : vector<8xf32>
    %8 = vector.multi_reduction <maximumf>, %5, %cst_6 [1] : vector<8x16xf32> to vector<8xf32>
    %9 = vector.shape_cast %8 : vector<8xf32> to vector<8x1xf32>
    %10 = arith.subf %9, %7 : vector<8x1xf32>
    %11 = tpu.reciprocal %10 : vector<8x1xf32> -> vector<8x1xf32>
    %12 = vector.broadcast %7 : vector<8x1xf32> to vector<8x16xf32>
    %13 = arith.subf %5, %12 : vector<8x16xf32>
    %14 = vector.broadcast %11 : vector<8x1xf32> to vector<8x16xf32>
    %15 = arith.mulf %13, %14 : vector<8x16xf32>
    %c0_7 = arith.constant 0 : index
    %c0_8 = arith.constant 0 : index
    %16 = vector.load %arg4[%c0_7, %c0_8] : memref<8x16xf32, #tpu.memory_space<vmem>>, vector<8x16xf32>
    tpu.vector_store %arg4[%c0_7, %c0_8], %15 {strides = array<i32>} : memref<8x16xf32, #tpu.memory_space<vmem>>, vector<8x16xf32>,
    return
  }
  func.func @transform_0(%arg0: i32) -> (i32, i32) {
    %c0_i32 = arith.constant 0 : i32
    %c0_i32_0 = arith.constant 0 : i32
    return %arg0, %c0_i32 : i32, i32
  }
  func.func @transform_1(%arg0: i32) -> (i32, i32) {
    %c0_i32 = arith.constant 0 : i32
    %c0_i32_0 = arith.constant 0 : i32
    %c0_i32_1 = arith.constant 0 : i32
    return %c0_i32, %c0_i32_0 : i32, i32
  }
  func.func @transform_2(%arg0: i32) -> (i32, i32) {
    %c0_i32 = arith.constant 0 : i32
    %c0_i32_0 = arith.constant 0 : i32
    %c0_i32_1 = arith.constant 0 : i32
    return %c0_i32, %c0_i32_0 : i32, i32
  }
  func.func @transform_3(%arg0: i32) -> (i32, i32) {
    %c0_i32 = arith.constant 0 : i32
    %c0_i32_0 = arith.constant 0 : i32
    return %arg0, %c0_i32 : i32, i32
  }
}

</mosaic_0001>

<llo_original>
// kernel: tpu_custom_call.1
$region0: #{tpu_custom_call.1}
  #allocation0 [shape = 'u32[]', space=smem, size = 0x4, offset = 0x4, fixed_abs, tag = 'smem constant byte address 0x4 - core index']
  #allocation1 [shape = 'u32[144,128]{1,0:T(1,128)}', space=vmem, size = 0x12000, scoped, tag = 'internal scratch']
  %s0 = inlined_call_operand.vmem [shape: f32[8,32], index: 0, kind: input, shape index: {}]
  %s1 = inlined_call_operand.vmem [shape: f32[32,16], index: 1, kind: input, shape index: {}]
  %s2 = inlined_call_operand.vmem [shape: f32[1,16], index: 2, kind: input, shape index: {}]
  %s3 = inlined_call_operand.hbm [shape: f32[8,16], index: 3, kind: output, shape index: {}]
  %s4 = sld [smem:[#allocation0]]
  $region22: #{tpu_custom_call.1} parent=0
    _
  %s6 = ssub.s32 1, %s4
  %s7 = scalar_select 0, %s6, %s4
  $region1: #{tpu_custom_call.1} parent=0
    #allocation2 [shape = 'u8[4096]{0}', space=vmem, size = 0x1000, scoped, tag = 'output window, operand 0, single buffered']
    #allocation3 [shape = 's32[1]{0}', space=sflag, size = 0x4, scoped, tag = 'scoped memory for tpu_custom_call.1']
    %8 = vsyncpa [#allocation3], 0
    // Predicated region
    $region2: #{tpu_custom_call.1} parent=1 // pred_check
      _
    $region3: #{tpu_custom_call.1} parent=1 // pred_check_branch
      %10 = sbr.rel (0) target = $region5
    $region4: #{tpu_custom_call.1} parent=1 // pred_region
      _
    $region5: #{tpu_custom_call.1} parent=1 // pred_fallthru
      _
    // Predicated region
    $region6: #{tpu_custom_call.1} parent=1 // pred_check
      _
    $region7: #{tpu_custom_call.1} parent=1 // pred_check_branch
      %12 = sbr.rel (0) target = $region9
    $region8: #{tpu_custom_call.1} parent=1 // pred_region
      _
    $region9: #{tpu_custom_call.1} parent=1 // pred_fallthru
      _
    // Predicated region
    $region10: #{tpu_custom_call.1} parent=1 // pred_check
      _
    $region11: #{tpu_custom_call.1} parent=1 // pred_check_branch
      %14 = sbr.rel (0) target = $region13
    $region12: #{tpu_custom_call.1} parent=1 // pred_region
      _
    $region13: #{tpu_custom_call.1} parent=1 // pred_fallthru
      _
    %v15 = vld [vmem:[%s0] sm:$0xff]
    %v16 = vld [vmem:[%s1] sm:$0xff]
    %v17 = vld [vmem:[%s1 + $0x8] sm:$0xff]
    %v18 = vld [vmem:[%s1 + $0x10] sm:$0xff]
    %v19 = vld [vmem:[%s1 + $0x18] sm:$0xff]
    %v20 = vld [vmem:[%s2] sm:$0x1]
    %v22 = vlaneseq
    %v23 = vshrl.u32 %v22, 7
    %v24 = vsub.s32 0, %v23
    %v25 = vrot.slane %v20, %v24
    %vm27 = vcmask 261120
    %v29 = vsel %vm27, %v15, 0
    %31 = vmatprep.subr.mxu0 0.0
    %32 = vmatpush1.msra.mxu0 0.0
    %33 = vmatprep.subr.mxu0 0.0
    %34 = vmatpush1.msra.mxu0 0.0
    %35 = vmatprep.subr.mxu0 0.0
    %36 = vmatpush1.msra.mxu0 0.0
    %37 = vmatprep.subr.mxu0 0.0
    %38 = vmatpush1.msra.mxu0 0.0
    %39 = vmatprep.subr.mxu0 0.0
    %40 = vmatpush1.msra.mxu0 0.0
    %41 = vmatprep.subr.mxu0 0.0
    %42 = vmatpush1.msra.mxu0 0.0
    %43 = vmatprep.subr.mxu0 0.0
    %44 = vmatpush1.msra.mxu0 0.0
    %45 = vmatprep.subr.mxu0 0.0
    %46 = vmatpush1.msra.mxu0 0.0
    %47 = vmatprep.subr.mxu0 0.0
    %48 = vmatpush1.msra.mxu0 0.0
    %49 = vmatprep.subr.mxu0 0.0
    %50 = vmatpush1.msra.mxu0 0.0
    %51 = vmatprep.subr.mxu0 0.0
    %52 = vmatpush1.msra.mxu0 0.0
    %53 = vmatprep.subr.mxu0 0.0
    %54 = vmatpush1.msra.mxu0 0.0
    %55 = vmatprep.subr.mxu0 0.0
    %56 = vmatpush1.msra.mxu0 %v19
    %57 = vmatprep.subr.mxu0 0.0
    %58 = vmatpush1.msra.mxu0 %v18
    %59 = vmatprep.subr.mxu0 0.0
    %60 = vmatpush1.msra.mxu0 %v17
    %61 = vmatprep.subr.mxu0 0.0
    %62 = vmatpush1.msra.mxu0 %v16
    %63 = vmatprep.subr.mxu0 0.0
    %64 = vmatpush2.msra.mxu0 0.0
    %65 = vmatprep.subr.mxu0 0.0
    %66 = vmatpush2.msra.mxu0 0.0
    %67 = vmatprep.subr.mxu0 0.0
    %68 = vmatpush2.msra.mxu0 0.0
    %69 = vmatprep.subr.mxu0 0.0
    %70 = vmatpush2.msra.mxu0 0.0
    %71 = vmatprep.subr.mxu0 0.0
    %72 = vmatpush2.msra.mxu0 0.0
    %73 = vmatprep.subr.mxu0 0.0
    %74 = vmatpush2.msra.mxu0 0.0
    %75 = vmatprep.subr.mxu0 0.0
    %76 = vmatpush2.msra.mxu0 0.0
    %77 = vmatprep.subr.mxu0 0.0
    %78 = vmatpush2.msra.mxu0 0.0
    %79 = vmatprep.subr.mxu0 0.0
    %80 = vmatpush2.msra.mxu0 0.0
    %81 = vmatprep.subr.mxu0 0.0
    %82 = vmatpush2.msra.mxu0 0.0
    %83 = vmatprep.subr.mxu0 0.0
    %84 = vmatpush2.msra.mxu0 0.0
    %85 = vmatprep.subr.mxu0 0.0
    %86 = vmatpush2.msra.mxu0 0.0
    %87 = vmatprep.subr.mxu0 0.0
    %88 = vmatpush2.msra.mxu0 0.0
    %89 = vmatprep.subr.mxu0 0.0
    %90 = vmatpush2.msra.mxu0 0.0
    %91 = vmatprep.subr.mxu0 0.0
    %92 = vmatpush2.msra.mxu0 0.0
    %93 = vmatprep.subr.mxu0 0.0
    %94 = vmatpush2.msra.mxu0 0.0
    %95 = vmatprep.mubr.f32.mxu0 0.0
    %96 = vmatmul.mubr.f32.gmra.mxu0 %v29
    %v97 = vpop.f32.mrf.mxu0
    %v98 = vadd.f32 %v25, %v97
    %v99 = vpop.f32.mrf.mxu0
    %100 = vdwg.mxu0
    %vm101 = vcmask 130048
    %v102 = vsel %vm101, %v98, inf
    %103 = vmin.xlane.f32.xlu0 %v102
    %v104 = vpop.xlane.xlu0 %103
    %v105 = vsel %vm101, %v98, -inf
    %106 = vmax.xlane.f32.xlu0 %v105
    %v107 = vpop.xlane.xlu0 %106
    %v108 = vsub.f32 %v107, %v104
    %v109 = vrcp.pop %v108
    %v110 = vsub.f32 %v98, %v104
    %v111 = vmul.f32 %v110, %v109
    %112 = vst.msk [vmem:[#allocation2] sm:$0xff] %vm101, %v111
    // Predicated region
    $region14: #{tpu_custom_call.1} parent=1 // pred_check
      _
    $region15: #{tpu_custom_call.1} parent=1 // pred_check_branch
      %114 = sbr.rel (0) target = $region17
    $region16: #{tpu_custom_call.1} parent=1 // pred_region
      %s116 = ssub.s32 128, 128
      %117 = vsyncadd [#allocation3], %s116
      %s119 = sshll.u32 [#allocation2], 4
      %s120 = int_to_ptr.vmem [resolvable:$true] %s119
      %122 = dma.vmem_to_hbm [thread:$0]  %s120, 128, %s3, [#allocation3]
    $region17: #{tpu_custom_call.1} parent=1 // pred_fallthru
      _
    // Predicated region
    $region18: #{tpu_custom_call.1} parent=1 // pred_check
      _
    $region19: #{tpu_custom_call.1} parent=1 // pred_check_branch
      %124 = sbr.rel (0) target = $region21
    $region20: #{tpu_custom_call.1} parent=1 // pred_region
      %125 = dma.done [#allocation3], 128
    $region21: #{tpu_custom_call.1} parent=1 // pred_fallthru
      _
    %126 = vsyncpa [#allocation3], 1

</llo_original>
